<compile_context>
chip_gen: v7x
topology: tpu7x:2x2x1
jax: 0.10.0
libtpu: 0.0.40
codegen_flags: <defaults>
</compile_context>

<pallas_src>
import functools

import jax
import jax.numpy as jnp
from jax.experimental import pallas as pl
from jax.experimental.pallas import tpu as pltpu


def _verifier_kernel(x_ref, w1_ref, b1_ref, w2_ref, b2_ref, o_ref, acc_ref,
                     *, precision=None):
    # x_ref  : (BM, D)     activation tile, natural (batch, feature) layout
    # w1_ref : (D, HT)     first-linear weight tile, (in_features, out_features)
    # b1_ref : (1, HT)     first-linear bias tile (row)
    # w2_ref : (1, HT)     second-linear weight tile (row)
    # b2_ref : (1,)        second-linear bias (SMEM scalar)
    # o_ref  : (BM, 1)     per-row verifier scores
    # acc_ref: (BM, 1) f32 scratch accumulator over the hidden-dim grid axis
    j = pl.program_id(1)

    @pl.when(j == 0)
    def _init():
        acc_ref[...] = jnp.zeros_like(acc_ref)

    # Linear(dim, 2*dim) tile on the MXU, f32 accumulation: (BM, D) @ (D, HT).
    h = jnp.dot(x_ref[...], w1_ref[...],
                preferred_element_type=jnp.float32, precision=precision)
    h = h + b1_ref[...].astype(jnp.float32)          # bias row broadcast over BM rows
    # SiLU: the logistic lowers through the EUP slot, the multiply stays on the VPU.
    h = h * jax.nn.sigmoid(h)
    # Linear(2*dim, 1) partial sum for this hidden tile: VPU multiply by the w2 row
    # plus an XLU lane reduction (keeps the MXU free); accumulate in f32.
    acc_ref[...] += jnp.sum(h * w2_ref[...].astype(jnp.float32),
                            axis=1, keepdims=True)

    @pl.when(j == pl.num_programs(1) - 1)
    def _finalize():
        y = acc_ref[...] + b2_ref[0]
        o_ref[...] = jax.nn.sigmoid(y).astype(o_ref.dtype)


def _vmem_capacity_bytes():
    try:
        return int(pltpu.get_tpu_info().vmem_capacity_bytes)
    except Exception:
        return 64 * 1024 * 1024  # conservative fallback (v7x per-TensorCore VMEM)


def state_verifier(states, w1, b1, w2, b2, *, block_m=512, block_h=512,
                   mxu_dtype=None, precision=None):
    """Pallas StateVerifier forward.

    states: (B, D).  Weights are stored (in_features, out_features) relative to
    torch.nn.Linear: w1 (D, 2D), b1 (2D,), w2 (2D, 1), b2 (1,).
    Returns (B,) == Sequential(Linear, SiLU, Linear, Sigmoid)(states).squeeze(-1).
    """
    B, D = states.shape
    H = 2 * D
    assert w1.shape == (D, H) and b1.shape == (H,)
    assert w2.shape == (H, 1) and b2.shape == (1,)

    out_dtype = states.dtype
    if mxu_dtype is not None:
        states = states.astype(mxu_dtype)
        w1 = w1.astype(mxu_dtype)

    x_item = jnp.dtype(states.dtype).itemsize
    w_item = jnp.dtype(w1.dtype).itemsize
    o_item = jnp.dtype(out_dtype).itemsize

    # ---- tile sizes ---------------------------------------------------------
    # Batch tile: multiple of 128; prefer >= 2 batch tiles when B > 128 so the
    # "parallel" axis can actually shard across v7x's two TensorCores.
    bm = max(block_m // 128, 1) * 128
    if B > 128:
        bm = min(bm, pl.cdiv(pl.cdiv(B, 2), 128) * 128)
    else:
        bm = min(bm, pl.cdiv(B, 128) * 128)
    # Hidden tile: multiple of 128 (or all of H when H < 128).  W1 is streamed in
    # (D, ht) blocks across the second ("arbitrary") grid axis.
    if H < 128:
        ht = H
    else:
        ht = min(max(block_h // 128, 1) * 128, pl.cdiv(H, 128) * 128)

    # ---- VMEM plan ----------------------------------------------------------
    vmem_cap = _vmem_capacity_bytes()
    budget = int(0.85 * vmem_cap)

    def vmem_est(bm_, ht_):
        return (2 * bm_ * D * x_item          # x tile, double-buffered
                + 2 * D * ht_ * w_item        # W1 tile, double-buffered
                + 8 * ht_ * w_item            # b1 / w2 row tiles (double-buffered)
                + bm_ * ht_ * 4               # f32 hidden intermediate
                + 4 * bm_ * 4                 # acc scratch + slack
                + 2 * bm_ * o_item)           # output tile

    # Shrink tiles (keeping multiples of 128) until the footprint fits this chip.
    while vmem_est(bm, ht) > budget and (bm > 128 or ht > 128):
        if bm >= ht and bm > 128:
            bm = max(128, ((bm // 2) // 128) * 128)
        elif ht > 128:
            ht = max(128, ((ht // 2) // 128) * 128)
        else:
            break

    grid_m = pl.cdiv(B, bm)
    b_pad = grid_m * bm
    grid_h = pl.cdiv(H, ht)
    h_pad = grid_h * ht

    vmem_limit = int(min(int(0.9 * vmem_cap),
                         max(2 * vmem_est(bm, ht), 32 * 1024 * 1024)))

    # ---- padding (zeros are exact: padded hidden units contribute 0) --------
    x = states
    if b_pad != B:
        x = jnp.pad(x, ((0, b_pad - B), (0, 0)))
    w1p = w1
    b1r = b1.reshape(1, H)
    w2r = w2.reshape(1, H)
    if h_pad != H:
        w1p = jnp.pad(w1p, ((0, 0), (0, h_pad - H)))
        b1r = jnp.pad(b1r, ((0, 0), (0, h_pad - H)))
        w2r = jnp.pad(w2r, ((0, 0), (0, h_pad - H)))
    b2s = b2.reshape(1).astype(jnp.float32)

    cost = pl.CostEstimate(
        flops=2 * B * D * H + 2 * B * H,
        transcendentals=B * H + B,
        bytes_accessed=(B * D * x_item + D * H * w_item
                        + (2 * H + 1) * 4 + B * o_item),
    )

    kernel = functools.partial(_verifier_kernel, precision=precision)

    out = pl.pallas_call(
        kernel,
        out_shape=jax.ShapeDtypeStruct((b_pad, 1), out_dtype),
        grid_spec=pltpu.PrefetchScalarGridSpec(
            num_scalar_prefetch=0,
            grid=(grid_m, grid_h),
            in_specs=[
                pl.BlockSpec((bm, D), lambda i, j: (i, 0)),      # x tile, natural layout
                pl.BlockSpec((D, ht), lambda i, j: (0, j)),      # W1 tile, streamed over H
                pl.BlockSpec((1, ht), lambda i, j: (0, j)),      # b1 row tile
                pl.BlockSpec((1, ht), lambda i, j: (0, j)),      # w2 row tile
                pl.BlockSpec(memory_space=pltpu.MemorySpace.SMEM),  # b2 scalar
            ],
            out_specs=pl.BlockSpec((bm, 1), lambda i, j: (i, 0)),
            scratch_shapes=[pltpu.VMEM((bm, 1), jnp.float32)],   # hidden-axis accumulator
        ),
        compiler_params=pltpu.CompilerParams(
            dimension_semantics=("parallel", "arbitrary"),
            vmem_limit_bytes=vmem_limit,
        ),
        cost_estimate=cost,
    )(x, w1p, b1r, w2r, b2s)

    return out.reshape(b_pad)[:B]


def _reference(states, w1, b1, w2, b2):
    h = states @ w1 + b1
    h = h * jax.nn.sigmoid(h)
    y = h @ w2 + b2
    return jax.nn.sigmoid(y).squeeze(-1)


def _make_inputs(key, B, D, dtype=jnp.float32):
    H = 2 * D
    k_x, k_w1, k_b1, k_w2, k_b2 = jax.random.split(key, 5)
    states = jax.random.normal(k_x, (B, D), dtype=dtype)
    w1 = jax.random.normal(k_w1, (D, H), dtype=dtype) * (1.0 / jnp.sqrt(D))
    b1 = jax.random.normal(k_b1, (H,), dtype=dtype) * 0.01
    w2 = jax.random.normal(k_w2, (H, 1), dtype=dtype) * (1.0 / jnp.sqrt(H))
    b2 = jax.random.normal(k_b2, (1,), dtype=dtype) * 0.01
    return states, w1, b1, w2, b2


if __name__ == "__main__":
    key = jax.random.PRNGKey(0)
    k0, k1 = jax.random.split(key, 2)

    # Case 1: small shapes matching the module spec (single tile on both axes).
    states, w1, b1, w2, b2 = _make_inputs(k0, B=16, D=32)
    out = jax.block_until_ready(state_verifier(states, w1, b1, w2, b2))
    ref = _reference(states, w1, b1, w2, b2)
    assert out.shape == (16,), out.shape
    err = float(jnp.max(jnp.abs(out - ref)))
    assert jnp.allclose(out, ref, atol=2e-5, rtol=2e-5), err

    # Case 2: exercises the multi-tile batch axis (grid_m=2) and the streamed
    # hidden-dimension grid axis with the scratch accumulator (grid_h=2).
    states, w1, b1, w2, b2 = _make_inputs(k1, B=200, D=128)
    out = jax.block_until_ready(
        state_verifier(states, w1, b1, w2, b2, block_m=128, block_h=128,
                       precision=jax.lax.Precision.HIGHEST))
    ref = _reference(states, w1, b1, w2, b2)
    assert out.shape == (200,), out.shape
    err = float(jnp.max(jnp.abs(out - ref)))
    assert jnp.allclose(out, ref, atol=1e-4, rtol=1e-4), err

    print("KERNEL_OK")
</pallas_src>

<mosaic_0001>
module attributes {stable_mosaic.version = 11 : i64} {
  func.func @_verifier_kernel(%arg0: i32, %arg1: i32, %arg2: memref<128x32xf32, #tpu.memory_space<vmem>>, %arg3: memref<32x64xf32, #tpu.memory_space<vmem>>, %arg4: memref<1x64xf32, #tpu.memory_space<vmem>>, %arg5: memref<1x64xf32, #tpu.memory_space<vmem>>, %arg6: memref<1xf32, #tpu.memory_space<smem>>, %arg7: memref<128x1xf32, #tpu.memory_space<vmem>>, %arg8: memref<128x1xf32, #tpu.memory_space<vmem>>) attributes {dimension_semantics = [#tpu.dimension_semantics<parallel>, #tpu.dimension_semantics<arbitrary>], iteration_bounds = array<i64: 1, 1>, scalar_prefetch = 0 : i64, scratch_operands = 1 : i64, tpu.core_type = #tpu.core_type<tc>, window_params = [{transform_indices = @transform_0, window_bounds = array<i64: 128, 32>}, {transform_indices = @transform_1, window_bounds = array<i64: 32, 64>}, {transform_indices = @transform_2, window_bounds = array<i64: 1, 64>}, {transform_indices = @transform_3, window_bounds = array<i64: 1, 64>}, {transform_indices = @transform_4, window_bounds = array<i64: 1>}, {transform_indices = @transform_5, window_bounds = array<i64: 128, 1>}]} {
    %c0_i32 = arith.constant 0 : i32
    %0 = arith.cmpi eq, %arg1, %c0_i32 : i32
    %1 = arith.extui %0 : i1 to i32
    %c0_i32_0 = arith.constant 0 : i32
    %2 = arith.cmpi ne, %1, %c0_i32_0 : i32
    scf.if %2 {
      %cst_16 = arith.constant 0.000000e+00 : f32
      %26 = vector.broadcast %cst_16 : f32 to vector<128x1xf32>
      %c0_17 = arith.constant 0 : index
      %c0_18 = arith.constant 0 : index
      %27 = vector.load %arg8[%c0_17, %c0_18] : memref<128x1xf32, #tpu.memory_space<vmem>>, vector<128x1xf32>
      tpu.vector_store %arg8[%c0_17, %c0_18], %26 {strides = array<i32>} : memref<128x1xf32, #tpu.memory_space<vmem>>, vector<128x1xf32>,
    } else {
    }
    %c0 = arith.constant 0 : index
    %c0_1 = arith.constant 0 : index
    %3 = vector.load %arg2[%c0, %c0_1] : memref<128x32xf32, #tpu.memory_space<vmem>>, vector<128x32xf32>
    %c0_2 = arith.constant 0 : index
    %c0_3 = arith.constant 0 : index
    %4 = vector.load %arg3[%c0_2, %c0_3] : memref<32x64xf32, #tpu.memory_space<vmem>>, vector<32x64xf32>
    %cst = arith.constant dense<0.000000e+00> : vector<128x64xf32>
    %5 = tpu.matmul %3, %4, %cst {dimension_numbers = #tpu.dot_dimension_numbers<[1], [0], [0], [1], [0, 0, 1, 1], [], []>} : vector<128x32xf32>, vector<32x64xf32>, vector<128x64xf32> -> vector<128x64xf32>
    %c0_4 = arith.constant 0 : index
    %c0_5 = arith.constant 0 : index
    %6 = vector.load %arg4[%c0_4, %c0_5] : memref<1x64xf32, #tpu.memory_space<vmem>>, vector<1x64xf32>
    %7 = vector.broadcast %6 : vector<1x64xf32> to vector<128x64xf32>
    %8 = arith.addf %5, %7 : vector<128x64xf32>
    %9 = arith.negf %8 : vector<128x64xf32>
    %10 = math.exp %9 : vector<128x64xf32>
    %cst_6 = arith.constant 1.000000e+00 : f32
    %11 = vector.broadcast %cst_6 : f32 to vector<128x64xf32>
    %12 = arith.addf %11, %10 : vector<128x64xf32>
    %13 = arith.divf %11, %12 : vector<128x64xf32>
    %14 = arith.mulf %8, %13 : vector<128x64xf32>
    %c0_7 = arith.constant 0 : index
    %c0_8 = arith.constant 0 : index
    %15 = vector.load %arg8[%c0_7, %c0_8] : memref<128x1xf32, #tpu.memory_space<vmem>>, vector<128x1xf32>
    %c0_9 = arith.constant 0 : index
    %c0_10 = arith.constant 0 : index
    %16 = vector.load %arg5[%c0_9, %c0_10] : memref<1x64xf32, #tpu.memory_space<vmem>>, vector<1x64xf32>
    %17 = vector.broadcast %16 : vector<1x64xf32> to vector<128x64xf32>
    %18 = arith.mulf %14, %17 : vector<128x64xf32>
    %cst_11 = arith.constant dense<0.000000e+00> : vector<128xf32>
    %19 = vector.multi_reduction <add>, %18, %cst_11 [1] : vector<128x64xf32> to vector<128xf32>
    %20 = vector.shape_cast %19 : vector<128xf32> to vector<128x1xf32>
    %21 = arith.addf %15, %20 : vector<128x1xf32>
    %c0_12 = arith.constant 0 : index
    %c0_13 = arith.constant 0 : index
    %22 = vector.load %arg8[%c0_12, %c0_13] : memref<128x1xf32, #tpu.memory_space<vmem>>, vector<128x1xf32>
    tpu.vector_store %arg8[%c0_12, %c0_13], %21 {strides = array<i32>} : memref<128x1xf32, #tpu.memory_space<vmem>>, vector<128x1xf32>,
    %c0_i32_14 = arith.constant 0 : i32
    %23 = arith.cmpi eq, %arg1, %c0_i32_14 : i32
    %24 = arith.extui %23 : i1 to i32
    %c0_i32_15 = arith.constant 0 : i32
    %25 = arith.cmpi ne, %24, %c0_i32_15 : i32
    scf.if %25 {
      %c0_16 = arith.constant 0 : index
      %c0_17 = arith.constant 0 : index
      %26 = vector.load %arg8[%c0_16, %c0_17] : memref<128x1xf32, #tpu.memory_space<vmem>>, vector<128x1xf32>
      %c0_18 = arith.constant 0 : index
      %27 = memref.load %arg6[%c0_18] : memref<1xf32, #tpu.memory_space<smem>>
      %28 = vector.broadcast %27 : f32 to vector<128x1xf32>
      %29 = arith.addf %26, %28 : vector<128x1xf32>
      %30 = arith.negf %29 : vector<128x1xf32>
      %31 = math.exp %30 : vector<128x1xf32>
      %cst_19 = arith.constant 1.000000e+00 : f32
      %32 = vector.broadcast %cst_19 : f32 to vector<128x1xf32>
      %33 = arith.addf %32, %31 : vector<128x1xf32>
      %34 = arith.divf %32, %33 : vector<128x1xf32>
      %c0_20 = arith.constant 0 : index
      %c0_21 = arith.constant 0 : index
      %35 = vector.load %arg7[%c0_20, %c0_21] : memref<128x1xf32, #tpu.memory_space<vmem>>, vector<128x1xf32>
      tpu.vector_store %arg7[%c0_20, %c0_21], %34 {strides = array<i32>} : memref<128x1xf32, #tpu.memory_space<vmem>>, vector<128x1xf32>,
    } else {
    }
    return
  }
  func.func @transform_0(%arg0: i32, %arg1: i32) -> (i32, i32) {
    %c0_i32 = arith.constant 0 : i32
    %c0_i32_0 = arith.constant 0 : i32
    return %arg0, %c0_i32 : i32, i32
  }
  func.func @transform_1(%arg0: i32, %arg1: i32) -> (i32, i32) {
    %c0_i32 = arith.constant 0 : i32
    %c0_i32_0 = arith.constant 0 : i32
    return %c0_i32, %arg1 : i32, i32
  }
  func.func @transform_2(%arg0: i32, %arg1: i32) -> (i32, i32) {
    %c0_i32 = arith.constant 0 : i32
    %c0_i32_0 = arith.constant 0 : i32
    return %c0_i32, %arg1 : i32, i32
  }
  func.func @transform_3(%arg0: i32, %arg1: i32) -> (i32, i32) {
    %c0_i32 = arith.constant 0 : i32
    %c0_i32_0 = arith.constant 0 : i32
    return %c0_i32, %arg1 : i32, i32
  }
  func.func @transform_4(%arg0: i32, %arg1: i32) -> i32 {
    %c0_i32 = arith.constant 0 : i32
    %c0_i32_0 = arith.constant 0 : i32
    return %c0_i32 : i32
  }
  func.func @transform_5(%arg0: i32, %arg1: i32) -> (i32, i32) {
    %c0_i32 = arith.constant 0 : i32
    %c0_i32_0 = arith.constant 0 : i32
    return %arg0, %c0_i32 : i32, i32
  }
}

</mosaic_0001>

<llo_original>
// kernel: tpu_custom_call.1
$region0: #{tpu_custom_call.1}
  #allocation0 [shape = 'u32[]', space=smem, size = 0x4, offset = 0x4, fixed_abs, tag = 'smem constant byte address 0x4 - core index']
  #allocation1 [shape = 'u32[144,128]{1,0:T(1,128)}', space=vmem, size = 0x12000, scoped, tag = 'internal scratch']
  #allocation2 [shape = 'f32[128,1]{1,0:T(8,128)}', space=vmem, size = 0x10000, scoped, tag = 'scratch operand']
  #allocation3 [shape = 'f32[1]{0:T(128)S(6)}', space=smem, size = 0x200, scoped, tag = 'scoped memory for tpu_custom_call.1']
  %s0 = inlined_call_operand.vmem [shape: f32[128,32], index: 0, kind: input, shape index: {}]
  %s1 = inlined_call_operand.vmem [shape: f32[32,64], index: 1, kind: input, shape index: {}]
  %s2 = inlined_call_operand.vmem [shape: f32[1,64], index: 2, kind: input, shape index: {}]
  %s3 = inlined_call_operand.vmem [shape: f32[1,64], index: 3, kind: input, shape index: {}]
  %s4 = inlined_call_operand.<no memory space> [shape: f32[1], index: 4, kind: input, shape index: {}]
  %s5 = inlined_call_operand.vmem [shape: f32[128,1], index: 5, kind: output, shape index: {}]
  %s6 = sld [smem:[#allocation0]]
  $region38: #{tpu_custom_call.1} parent=0
    _
  %s8 = ssub.s32 1, %s6
  %s9 = scalar_select 0, %s8, %s6
  %10 = sst [smem:[#allocation3]] %s4
  // Predicated region
  $region2: #{tpu_custom_call.1} parent=0 // pred_check
    _
  $region3: #{tpu_custom_call.1} parent=0 // pred_check_branch
    %12 = sbr.rel (0) target = $region5
  $region4: #{tpu_custom_call.1} parent=0 // pred_region
    _
  $region5: #{tpu_custom_call.1} parent=0 // pred_fallthru
    _
  // Predicated region
  $region6: #{tpu_custom_call.1} parent=0 // pred_check
    _
  $region7: #{tpu_custom_call.1} parent=0 // pred_check_branch
    %14 = sbr.rel (0) target = $region9
  $region8: #{tpu_custom_call.1} parent=0 // pred_region
    _
  $region9: #{tpu_custom_call.1} parent=0 // pred_fallthru
    _
  // Predicated region
  $region10: #{tpu_custom_call.1} parent=0 // pred_check
    _
  $region11: #{tpu_custom_call.1} parent=0 // pred_check_branch
    %16 = sbr.rel (0) target = $region13
  $region12: #{tpu_custom_call.1} parent=0 // pred_region
    _
  $region13: #{tpu_custom_call.1} parent=0 // pred_fallthru
    _
  // Predicated region
  $region14: #{tpu_custom_call.1} parent=0 // pred_check
    _
  $region15: #{tpu_custom_call.1} parent=0 // pred_check_branch
    %18 = sbr.rel (0) target = $region17
  $region16: #{tpu_custom_call.1} parent=0 // pred_region
    _
  $region17: #{tpu_custom_call.1} parent=0 // pred_fallthru
    _
  // Predicated region
  $region18: #{tpu_custom_call.1} parent=0 // pred_check
    _
  $region19: #{tpu_custom_call.1} parent=0 // pred_check_branch
    %20 = sbr.rel (0) target = $region21
  $region20: #{tpu_custom_call.1} parent=0 // pred_region
    _
  $region21: #{tpu_custom_call.1} parent=0 // pred_fallthru
    _
  %p21 = scmp.eq.s32.totalorder 0, 0
  // Predicated region
  $region22: #{tpu_custom_call.1} parent=0 // pred_check
    %p22 = pneg %p21
  $region23: #{tpu_custom_call.1} parent=0 // pred_check_branch
    %24 = sbr.rel (%p22) target = $region25
  $region24: #{tpu_custom_call.1} parent=0 // pred_region
    %vm25 = vcmask 7168
    %26 = vst.msk [vmem:[#allocation2] sm:$0xff] %vm25, 0.0
    %27 = vst.msk [vmem:[#allocation2 + $0x8] sm:$0xff] %vm25, 0.0
    %28 = vst.msk [vmem:[#allocation2 + $0x10] sm:$0xff] %vm25, 0.0
    %29 = vst.msk [vmem:[#allocation2 + $0x18] sm:$0xff] %vm25, 0.0
    %30 = vst.msk [vmem:[#allocation2 + $0x20] sm:$0xff] %vm25, 0.0
    %31 = vst.msk [vmem:[#allocation2 + $0x28] sm:$0xff] %vm25, 0.0
    %32 = vst.msk [vmem:[#allocation2 + $0x30] sm:$0xff] %vm25, 0.0
    %33 = vst.msk [vmem:[#allocation2 + $0x38] sm:$0xff] %vm25, 0.0
    %34 = vst.msk [vmem:[#allocation2 + $0x40] sm:$0xff] %vm25, 0.0
    %35 = vst.msk [vmem:[#allocation2 + $0x48] sm:$0xff] %vm25, 0.0
    %36 = vst.msk [vmem:[#allocation2 + $0x50] sm:$0xff] %vm25, 0.0
    %37 = vst.msk [vmem:[#allocation2 + $0x58] sm:$0xff] %vm25, 0.0
    %38 = vst.msk [vmem:[#allocation2 + $0x60] sm:$0xff] %vm25, 0.0
    %39 = vst.msk [vmem:[#allocation2 + $0x68] sm:$0xff] %vm25, 0.0
    %40 = vst.msk [vmem:[#allocation2 + $0x70] sm:$0xff] %vm25, 0.0
    %41 = vst.msk [vmem:[#allocation2 + $0x78] sm:$0xff] %vm25, 0.0
  $region25: #{tpu_custom_call.1} parent=0 // pred_fallthru
    _
  %v42 = vld [vmem:[%s0] sm:$0xff]
  %v43 = vld [vmem:[%s0 + $0x8] sm:$0xff]
  %v44 = vld [vmem:[%s0 + $0x10] sm:$0xff]
  %v45 = vld [vmem:[%s0 + $0x18] sm:$0xff]
  %v46 = vld [vmem:[%s0 + $0x20] sm:$0xff]
  %v47 = vld [vmem:[%s0 + $0x28] sm:$0xff]
  %v48 = vld [vmem:[%s0 + $0x30] sm:$0xff]
  %v49 = vld [vmem:[%s0 + $0x38] sm:$0xff]
  %v50 = vld [vmem:[%s0 + $0x40] sm:$0xff]
  %v51 = vld [vmem:[%s0 + $0x48] sm:$0xff]
  %v52 = vld [vmem:[%s0 + $0x50] sm:$0xff]
  %v53 = vld [vmem:[%s0 + $0x58] sm:$0xff]
  %v54 = vld [vmem:[%s0 + $0x60] sm:$0xff]
  %v55 = vld [vmem:[%s0 + $0x68] sm:$0xff]
  %v56 = vld [vmem:[%s0 + $0x70] sm:$0xff]
  %v57 = vld [vmem:[%s0 + $0x78] sm:$0xff]
  %v58 = vld [vmem:[%s1] sm:$0xff]
  %v59 = vld [vmem:[%s1 + $0x8] sm:$0xff]
  %v60 = vld [vmem:[%s1 + $0x10] sm:$0xff]
  %v61 = vld [vmem:[%s1 + $0x18] sm:$0xff]
  %v62 = vld [vmem:[%s2] sm:$0x1]
  %v64 = vlaneseq
  %v65 = vshrl.u32 %v64, 7
  %v66 = vsub.s32 0, %v65
  %v67 = vrot.slane %v62, %v66
  %vm69 = vcmask 261120
  %v71 = vsel %vm69, %v42, 0
  %v74 = vsel %vm69, %v43, 0
  %v77 = vsel %vm69, %v44, 0
  %v80 = vsel %vm69, %v45, 0
  %v83 = vsel %vm69, %v46, 0
  %v86 = vsel %vm69, %v47, 0
  %v89 = vsel %vm69, %v48, 0
  %v92 = vsel %vm69, %v49, 0
  %v95 = vsel %vm69, %v50, 0
  %v98 = vsel %vm69, %v51, 0
  %v101 = vsel %vm69, %v52, 0
  %v104 = vsel %vm69, %v53, 0
  %v107 = vsel %vm69, %v54, 0
  %v110 = vsel %vm69, %v55, 0
  %v113 = vsel %vm69, %v56, 0
  %v116 = vsel %vm69, %v57, 0
  %118 = vmatprep.subr.mxu0 0.0
  %119 = vmatpush1.msra.mxu0 %v58
  %120 = vmatprep.subr.mxu0 0.0
  %121 = vmatpush1.msra.mxu0 %v59
  %122 = vmatprep.subr.mxu0 0.0
  %123 = vmatpush1.msra.mxu0 %v60
  %124 = vmatprep.subr.mxu0 0.0
  %125 = vmatpush1.msra.mxu0 %v61
  %126 = vmatprep.subr.mxu0 0.0
  %127 = vmatpush1.msra.mxu0 0.0
  %128 = vmatprep.subr.mxu0 0.0
  %129 = vmatpush1.msra.mxu0 0.0
  %130 = vmatprep.subr.mxu0 0.0
  %131 = vmatpush1.msra.mxu0 0.0
  %132 = vmatprep.subr.mxu0 0.0
  %133 = vmatpush1.msra.mxu0 0.0
  %134 = vmatprep.subr.mxu0 0.0
  %135 = vmatpush1.msra.mxu0 0.0
  %136 = vmatprep.subr.mxu0 0.0
  %137 = vmatpush1.msra.mxu0 0.0
  %138 = vmatprep.subr.mxu0 0.0
  %139 = vmatpush1.msra.mxu0 0.0
  %140 = vmatprep.subr.mxu0 0.0
  %141 = vmatpush1.msra.mxu0 0.0
  %142 = vmatprep.subr.mxu0 0.0
  %143 = vmatpush1.msra.mxu0 0.0
  %144 = vmatprep.subr.mxu0 0.0
  %145 = vmatpush1.msra.mxu0 0.0
  %146 = vmatprep.subr.mxu0 0.0
  %147 = vmatpush1.msra.mxu0 0.0
  %148 = vmatprep.subr.mxu0 0.0
  %149 = vmatpush1.msra.mxu0 0.0
  %150 = vmatprep.subr.mxu0 0.0
  %151 = vmatpush1.msra.mxu0 0.0
  %152 = vmatprep.subr.mxu0 0.0
  %153 = vmatpush1.msra.mxu0 0.0
  %154 = vmatprep.subr.mxu0 0.0
  %155 = vmatpush1.msra.mxu0 0.0
  %156 = vmatprep.subr.mxu0 0.0
  %157 = vmatpush1.msra.mxu0 0.0
  %158 = vmatprep.subr.mxu0 0.0
  %159 = vmatpush1.msra.mxu0 0.0
  %160 = vmatprep.subr.mxu0 0.0
  %161 = vmatpush1.msra.mxu0 0.0
  %162 = vmatprep.subr.mxu0 0.0
  %163 = vmatpush1.msra.mxu0 0.0
  %164 = vmatprep.subr.mxu0 0.0
  %165 = vmatpush1.msra.mxu0 0.0
  %166 = vmatprep.subr.mxu0 0.0
  %167 = vmatpush1.msra.mxu0 0.0
  %168 = vmatprep.subr.mxu0 0.0
  %169 = vmatpush1.msra.mxu0 0.0
  %170 = vmatprep.subr.mxu0 0.0
  %171 = vmatpush1.msra.mxu0 0.0
  %172 = vmatprep.subr.mxu0 0.0
  %173 = vmatpush1.msra.mxu0 0.0
  %174 = vmatprep.subr.mxu0 0.0
  %175 = vmatpush1.msra.mxu0 0.0
  %176 = vmatprep.subr.mxu0 0.0
  %177 = vmatpush1.msra.mxu0 0.0
  %178 = vmatprep.subr.mxu0 0.0
  %179 = vmatpush1.msra.mxu0 0.0
  %180 = vmatprep.subr.mxu0 0.0
  %181 = vmatpush1.msra.mxu0 0.0
  %182 = vmatprep.mubr.f32.mxu0 0.0
  %183 = vmatmul.mubr.f32.gmra.mrb[0].mxu0 %v71
  %v184 = vpop.f32.mrb[0].mxu0
  %v185 = vadd.f32 %v67, %v184
  %v186 = vpop.f32.mrb[0].mxu0
  %187 = vmatprep.mubr.f32.mxu0 0.0
  %188 = vmatmul.mubr.f32.gmra.mrb[0].mxu0 %v74
  %v189 = vpop.f32.mrb[0].mxu0
  %v190 = vadd.f32 %v67, %v189
  %v191 = vpop.f32.mrb[0].mxu0
  %192 = vmatprep.mubr.f32.mxu0 0.0
  %193 = vmatmul.mubr.f32.gmra.mrb[0].mxu0 %v77
  %v194 = vpop.f32.mrb[0].mxu0
  %v195 = vadd.f32 %v67, %v194
  %v196 = vpop.f32.mrb[0].mxu0
  %197 = vmatprep.mubr.f32.mxu0 0.0
  %198 = vmatmul.mubr.f32.gmra.mrb[0].mxu0 %v80
  %v199 = vpop.f32.mrb[0].mxu0
  %v200 = vadd.f32 %v67, %v199
  %v201 = vpop.f32.mrb[0].mxu0
  %202 = vmatprep.mubr.f32.mxu0 0.0
  %203 = vmatmul.mubr.f32.gmra.mrb[0].mxu0 %v83
  %v204 = vpop.f32.mrb[0].mxu0
  %v205 = vadd.f32 %v67, %v204
  %v206 = vpop.f32.mrb[0].mxu0
  %207 = vmatprep.mubr.f32.mxu0 0.0
  %208 = vmatmul.mubr.f32.gmra.mrb[0].mxu0 %v86
  %v209 = vpop.f32.mrb[0].mxu0
  %v210 = vadd.f32 %v67, %v209
  %v211 = vpop.f32.mrb[0].mxu0
  %212 = vmatprep.mubr.f32.mxu0 0.0
  %213 = vmatmul.mubr.f32.gmra.mrb[0].mxu0 %v89
  %v214 = vpop.f32.mrb[0].mxu0
  %v215 = vadd.f32 %v67, %v214
  %v216 = vpop.f32.mrb[0].mxu0
  %217 = vmatprep.mubr.f32.mxu0 0.0
  %218 = vmatmul.mubr.f32.gmra.mrb[0].mxu0 %v92
  %v219 = vpop.f32.mrb[0].mxu0
  %v220 = vadd.f32 %v67, %v219
  %v221 = vpop.f32.mrb[0].mxu0
  %222 = vmatprep.mubr.f32.mxu0 0.0
  %223 = vmatmul.mubr.f32.gmra.mrb[0].mxu0 %v95
  %v224 = vpop.f32.mrb[0].mxu0
  %v225 = vadd.f32 %v67, %v224
  %v226 = vpop.f32.mrb[0].mxu0
  %227 = vmatprep.mubr.f32.mxu0 0.0
  %228 = vmatmul.mubr.f32.gmra.mrb[0].mxu0 %v98
  %v229 = vpop.f32.mrb[0].mxu0
  %v230 = vadd.f32 %v67, %v229
  %v231 = vpop.f32.mrb[0].mxu0
  %232 = vmatprep.mubr.f32.mxu0 0.0
  %233 = vmatmul.mubr.f32.gmra.mrb[0].mxu0 %v101
  %v234 = vpop.f32.mrb[0].mxu0
  %v235 = vadd.f32 %v67, %v234
  %v236 = vpop.f32.mrb[0].mxu0
  %237 = vmatprep.mubr.f32.mxu0 0.0
  %238 = vmatmul.mubr.f32.gmra.mrb[0].mxu0 %v104
  %v239 = vpop.f32.mrb[0].mxu0
  %v240 = vadd.f32 %v67, %v239
  %v241 = vpop.f32.mrb[0].mxu0
  %242 = vmatprep.mubr.f32.mxu0 0.0
  %243 = vmatmul.mubr.f32.gmra.mrb[0].mxu0 %v107
  %v244 = vpop.f32.mrb[0].mxu0
  %v245 = vadd.f32 %v67, %v244
  %v246 = vpop.f32.mrb[0].mxu0
  %247 = vmatprep.mubr.f32.mxu0 0.0
  %248 = vmatmul.mubr.f32.gmra.mrb[0].mxu0 %v110
  %v249 = vpop.f32.mrb[0].mxu0
  %v250 = vadd.f32 %v67, %v249
  %v251 = vpop.f32.mrb[0].mxu0
  %252 = vmatprep.mubr.f32.mxu0 0.0
  %253 = vmatmul.mubr.f32.gmra.mrb[0].mxu0 %v113
  %v254 = vpop.f32.mrb[0].mxu0
  %v255 = vadd.f32 %v67, %v254
  %v256 = vpop.f32.mrb[0].mxu0
  %257 = vmatprep.mubr.f32.mxu0 0.0
  %258 = vmatmul.mubr.f32.gmra.mrb[0].mxu0 %v116
  %v259 = vpop.f32.mrb[0].mxu0
  %v260 = vadd.f32 %v67, %v259
  %v261 = vpop.f32.mrb[0].mxu0
  %262 = vdwg.mxu0
  %v263 = vxor.u32 %v185, 2147483648
  %v264 = vxor.u32 %v190, 2147483648
  %v265 = vxor.u32 %v195, 2147483648
  %v266 = vxor.u32 %v200, 2147483648
  %v267 = vxor.u32 %v205, 2147483648
  %v268 = vxor.u32 %v210, 2147483648
  %v269 = vxor.u32 %v215, 2147483648
  %v270 = vxor.u32 %v220, 2147483648
  %v271 = vxor.u32 %v225, 2147483648
  %v272 = vxor.u32 %v230, 2147483648
  %v273 = vxor.u32 %v235, 2147483648
  %v274 = vxor.u32 %v240, 2147483648
  %v275 = vxor.u32 %v245, 2147483648
  %v276 = vxor.u32 %v250, 2147483648
  %v277 = vxor.u32 %v255, 2147483648
  %v278 = vxor.u32 %v260, 2147483648
  %v279 = vmul.f32 %v263, 1.442695
  %v280 = vpow.pop %v279
  %v281 = vmul.f32 %v264, 1.442695
  %v282 = vpow.pop %v281
  %v283 = vmul.f32 %v265, 1.442695
  %v284 = vpow.pop %v283
  %v285 = vmul.f32 %v266, 1.442695
  %v286 = vpow.pop %v285
  %v287 = vmul.f32 %v267, 1.442695
  %v288 = vpow.pop %v287
  %v289 = vmul.f32 %v268, 1.442695
  %v290 = vpow.pop %v289
  %v291 = vmul.f32 %v269, 1.442695
  %v292 = vpow.pop %v291
  %v293 = vmul.f32 %v270, 1.442695
  %v294 = vpow.pop %v293
  %v295 = vmul.f32 %v271, 1.442695
  %v296 = vpow.pop %v295
  %v297 = vmul.f32 %v272, 1.442695
  %v298 = vpow.pop %v297
  %v299 = vmul.f32 %v273, 1.442695
  %v300 = vpow.pop %v299
  %v301 = vmul.f32 %v274, 1.442695
  %v302 = vpow.pop %v301
  %v303 = vmul.f32 %v275, 1.442695
  %v304 = vpow.pop %v303
  %v305 = vmul.f32 %v276, 1.442695
  %v306 = vpow.pop %v305
  %v307 = vmul.f32 %v277, 1.442695
  %v308 = vpow.pop %v307
  %v309 = vmul.f32 %v278, 1.442695
  %v310 = vpow.pop %v309
  %v311 = vadd.f32 %v280, 1.0
  %v312 = vadd.f32 %v282, 1.0
  %v313 = vadd.f32 %v284, 1.0
  %v314 = vadd.f32 %v286, 1.0
  %v315 = vadd.f32 %v288, 1.0
  %v316 = vadd.f32 %v290, 1.0
  %v317 = vadd.f32 %v292, 1.0
  %v318 = vadd.f32 %v294, 1.0
  %v319 = vadd.f32 %v296, 1.0
  %v320 = vadd.f32 %v298, 1.0
  %v321 = vadd.f32 %v300, 1.0
  %v322 = vadd.f32 %v302, 1.0
  %v323 = vadd.f32 %v304, 1.0
  %v324 = vadd.f32 %v306, 1.0
  %v325 = vadd.f32 %v308, 1.0
  %v326 = vadd.f32 %v310, 1.0
  %v327 = vrcp.pop %v311
  %v328 = vmul.f32 1.0, %v327
  %v329 = vrcp.pop %v312
  %v330 = vmul.f32 1.0, %v329
  %v331 = vrcp.pop %v313
  %v332 = vmul.f32 1.0, %v331
  %v333 = vrcp.pop %v314
  %v334 = vmul.f32 1.0, %v333
  %v335 = vrcp.pop %v315
  %v336 = vmul.f32 1.0, %v335
  %v337 = vrcp.pop %v316
  %v338 = vmul.f32 1.0, %v337
  %v339 = vrcp.pop %v317
  %v340 = vmul.f32 1.0, %v339
  %v341 = vrcp.pop %v318
  %v342 = vmul.f32 1.0, %v341
  %v343 = vrcp.pop %v319
  %v344 = vmul.f32 1.0, %v343
  %v345 = vrcp.pop %v320
  %v346 = vmul.f32 1.0, %v345
  %v347 = vrcp.pop %v321
  %v348 = vmul.f32 1.0, %v347
  %v349 = vrcp.pop %v322
  %v350 = vmul.f32 1.0, %v349
  %v351 = vrcp.pop %v323
  %v352 = vmul.f32 1.0, %v351
  %v353 = vrcp.pop %v324
  %v354 = vmul.f32 1.0, %v353
  %v355 = vrcp.pop %v325
  %v356 = vmul.f32 1.0, %v355
  %v357 = vrcp.pop %v326
  %v358 = vmul.f32 1.0, %v357
  %v359 = vmul.f32 %v185, %v328
  %v360 = vmul.f32 %v190, %v330
  %v361 = vmul.f32 %v195, %v332
  %v362 = vmul.f32 %v200, %v334
  %v363 = vmul.f32 %v205, %v336
  %v364 = vmul.f32 %v210, %v338
  %v365 = vmul.f32 %v215, %v340
  %v366 = vmul.f32 %v220, %v342
  %v367 = vmul.f32 %v225, %v344
  %v368 = vmul.f32 %v230, %v346
  %v369 = vmul.f32 %v235, %v348
  %v370 = vmul.f32 %v240, %v350
  %v371 = vmul.f32 %v245, %v352
  %v372 = vmul.f32 %v250, %v354
  %v373 = vmul.f32 %v255, %v356
  %v374 = vmul.f32 %v260, %v358
  %v375 = vld [vmem:[#allocation2] sm:$0xff]
  %v376 = vld [vmem:[#allocation2 + $0x8] sm:$0xff]
  %v377 = vld [vmem:[#allocation2 + $0x10] sm:$0xff]
  %v378 = vld [vmem:[#allocation2 + $0x18] sm:$0xff]
  %v379 = vld [vmem:[#allocation2 + $0x20] sm:$0xff]
  %v380 = vld [vmem:[#allocation2 + $0x28] sm:$0xff]
  %v381 = vld [vmem:[#allocation2 + $0x30] sm:$0xff]
  %v382 = vld [vmem:[#allocation2 + $0x38] sm:$0xff]
  %v383 = vld [vmem:[#allocation2 + $0x40] sm:$0xff]
  %v384 = vld [vmem:[#allocation2 + $0x48] sm:$0xff]
  %v385 = vld [vmem:[#allocation2 + $0x50] sm:$0xff]
  %v386 = vld [vmem:[#allocation2 + $0x58] sm:$0xff]
  %v387 = vld [vmem:[#allocation2 + $0x60] sm:$0xff]
  %v388 = vld [vmem:[#allocation2 + $0x68] sm:$0xff]
  %v389 = vld [vmem:[#allocation2 + $0x70] sm:$0xff]
  %v390 = vld [vmem:[#allocation2 + $0x78] sm:$0xff]
  %v391 = vld [vmem:[%s3] sm:$0x1]
  %v393 = vlaneseq
  %v394 = vshrl.u32 %v393, 7
  %v395 = vsub.s32 0, %v394
  %v396 = vrot.slane %v391, %v395
  %v398 = vmul.f32 %v359, %v396
  %v399 = vmul.f32 %v360, %v396
  %v400 = vmul.f32 %v361, %v396
  %v401 = vmul.f32 %v362, %v396
  %v402 = vmul.f32 %v363, %v396
  %v403 = vmul.f32 %v364, %v396
  %v404 = vmul.f32 %v365, %v396
  %v405 = vmul.f32 %v366, %v396
  %v406 = vmul.f32 %v367, %v396
  %v407 = vmul.f32 %v368, %v396
  %v408 = vmul.f32 %v369, %v396
  %v409 = vmul.f32 %v370, %v396
  %v410 = vmul.f32 %v371, %v396
  %v411 = vmul.f32 %v372, %v396
  %v412 = vmul.f32 %v373, %v396
  %v413 = vmul.f32 %v374, %v396
  %vm414 = vcmask 523264
  %v415 = vsel %vm414, %v398, 0.0
  %416 = vadd.xlane.f32.xlu0 %v415
  %v417 = vpop.xlane.xlu0 %416
  %v418 = vsel %vm414, %v399, 0.0
  %419 = vadd.xlane.f32.xlu0 %v418
  %v420 = vpop.xlane.xlu0 %419
  %v421 = vsel %vm414, %v400, 0.0
  %422 = vadd.xlane.f32.xlu0 %v421
  %v423 = vpop.xlane.xlu0 %422
  %v424 = vsel %vm414, %v401, 0.0
  %425 = vadd.xlane.f32.xlu0 %v424
  %v426 = vpop.xlane.xlu0 %425
  %v427 = vsel %vm414, %v402, 0.0
  %428 = vadd.xlane.f32.xlu0 %v427
  %v429 = vpop.xlane.xlu0 %428
  %v430 = vsel %vm414, %v403, 0.0
  %431 = vadd.xlane.f32.xlu0 %v430
  %v432 = vpop.xlane.xlu0 %431
  %v433 = vsel %vm414, %v404, 0.0
  %434 = vadd.xlane.f32.xlu0 %v433
  %v435 = vpop.xlane.xlu0 %434
  %v436 = vsel %vm414, %v405, 0.0
  %437 = vadd.xlane.f32.xlu0 %v436
  %v438 = vpop.xlane.xlu0 %437
  %v439 = vsel %vm414, %v406, 0.0
  %440 = vadd.xlane.f32.xlu0 %v439
  %v441 = vpop.xlane.xlu0 %440
  %v442 = vsel %vm414, %v407, 0.0
  %443 = vadd.xlane.f32.xlu0 %v442
  %v444 = vpop.xlane.xlu0 %443
  %v445 = vsel %vm414, %v408, 0.0
  %446 = vadd.xlane.f32.xlu0 %v445
  %v447 = vpop.xlane.xlu0 %446
  %v448 = vsel %vm414, %v409, 0.0
  %449 = vadd.xlane.f32.xlu0 %v448
  %v450 = vpop.xlane.xlu0 %449
  %v451 = vsel %vm414, %v410, 0.0
  %452 = vadd.xlane.f32.xlu0 %v451
  %v453 = vpop.xlane.xlu0 %452
  %v454 = vsel %vm414, %v411, 0.0
  %455 = vadd.xlane.f32.xlu0 %v454
  %v456 = vpop.xlane.xlu0 %455
  %v457 = vsel %vm414, %v412, 0.0
  %458 = vadd.xlane.f32.xlu0 %v457
  %v459 = vpop.xlane.xlu0 %458
  %v460 = vsel %vm414, %v413, 0.0
  %461 = vadd.xlane.f32.xlu0 %v460
  %v462 = vpop.xlane.xlu0 %461
  %v463 = vadd.f32 %v375, %v417
  %v464 = vadd.f32 %v376, %v420
  %v465 = vadd.f32 %v377, %v423
  %v466 = vadd.f32 %v378, %v426
  %v467 = vadd.f32 %v379, %v429
  %v468 = vadd.f32 %v380, %v432
  %v469 = vadd.f32 %v381, %v435
  %v470 = vadd.f32 %v382, %v438
  %v471 = vadd.f32 %v383, %v441
  %v472 = vadd.f32 %v384, %v444
  %v473 = vadd.f32 %v385, %v447
  %v474 = vadd.f32 %v386, %v450
  %v475 = vadd.f32 %v387, %v453
  %v476 = vadd.f32 %v388, %v456
  %v477 = vadd.f32 %v389, %v459
  %v478 = vadd.f32 %v390, %v462
  %vm479 = vcmask 7168
  %480 = vst.msk [vmem:[#allocation2] sm:$0xff] %vm479, %v463
  %481 = vst.msk [vmem:[#allocation2 + $0x8] sm:$0xff] %vm479, %v464
  %482 = vst.msk [vmem:[#allocation2 + $0x10] sm:$0xff] %vm479, %v465
  %483 = vst.msk [vmem:[#allocation2 + $0x18] sm:$0xff] %vm479, %v466
  %484 = vst.msk [vmem:[#allocation2 + $0x20] sm:$0xff] %vm479, %v467
  %485 = vst.msk [vmem:[#allocation2 + $0x28] sm:$0xff] %vm479, %v468
  %486 = vst.msk [vmem:[#allocation2 + $0x30] sm:$0xff] %vm479, %v469
  %487 = vst.msk [vmem:[#allocation2 + $0x38] sm:$0xff] %vm479, %v470
  %488 = vst.msk [vmem:[#allocation2 + $0x40] sm:$0xff] %vm479, %v471
  %489 = vst.msk [vmem:[#allocation2 + $0x48] sm:$0xff] %vm479, %v472
  %490 = vst.msk [vmem:[#allocation2 + $0x50] sm:$0xff] %vm479, %v473
  %491 = vst.msk [vmem:[#allocation2 + $0x58] sm:$0xff] %vm479, %v474
  %492 = vst.msk [vmem:[#allocation2 + $0x60] sm:$0xff] %vm479, %v475
  %493 = vst.msk [vmem:[#allocation2 + $0x68] sm:$0xff] %vm479, %v476
  %494 = vst.msk [vmem:[#allocation2 + $0x70] sm:$0xff] %vm479, %v477
  %495 = vst.msk [vmem:[#allocation2 + $0x78] sm:$0xff] %vm479, %v478
  // Predicated region
  $region26: #{tpu_custom_call.1} parent=0 // pred_check
    %p496 = pneg %p21
  $region27: #{tpu_custom_call.1} parent=0 // pred_check_branch
    %498 = sbr.rel (%p496) target = $region29
  $region28: #{tpu_custom_call.1} parent=0 // pred_region
    %v499 = vld [vmem:[#allocation2] sm:$0xff]
    %v500 = vld [vmem:[#allocation2 + $0x8] sm:$0xff]
    %v501 = vld [vmem:[#allocation2 + $0x10] sm:$0xff]
    %v502 = vld [vmem:[#allocation2 + $0x18] sm:$0xff]
    %v503 = vld [vmem:[#allocation2 + $0x20] sm:$0xff]
    %v504 = vld [vmem:[#allocation2 + $0x28] sm:$0xff]
    %v505 = vld [vmem:[#allocation2 + $0x30] sm:$0xff]
    %v506 = vld [vmem:[#allocation2 + $0x38] sm:$0xff]
    %v507 = vld [vmem:[#allocation2 + $0x40] sm:$0xff]
    %v508 = vld [vmem:[#allocation2 + $0x48] sm:$0xff]
    %v509 = vld [vmem:[#allocation2 + $0x50] sm:$0xff]
    %v510 = vld [vmem:[#allocation2 + $0x58] sm:$0xff]
    %v511 = vld [vmem:[#allocation2 + $0x60] sm:$0xff]
    %v512 = vld [vmem:[#allocation2 + $0x68] sm:$0xff]
    %v513 = vld [vmem:[#allocation2 + $0x70] sm:$0xff]
    %v514 = vld [vmem:[#allocation2 + $0x78] sm:$0xff]
    %s515 = sld [smem:[#allocation3]]
    %v516 = vstv %s515
    %v517 = vadd.f32 %v499, %v516
    %v518 = vadd.f32 %v500, %v516
    %v519 = vadd.f32 %v501, %v516
    %v520 = vadd.f32 %v502, %v516
    %v521 = vadd.f32 %v503, %v516
    %v522 = vadd.f32 %v504, %v516
    %v523 = vadd.f32 %v505, %v516
    %v524 = vadd.f32 %v506, %v516
    %v525 = vadd.f32 %v507, %v516
    %v526 = vadd.f32 %v508, %v516
    %v527 = vadd.f32 %v509, %v516
    %v528 = vadd.f32 %v510, %v516
    %v529 = vadd.f32 %v511, %v516
    %v530 = vadd.f32 %v512, %v516
    %v531 = vadd.f32 %v513, %v516
    %v532 = vadd.f32 %v514, %v516
    %v533 = vxor.u32 %v517, 2147483648
    %v534 = vxor.u32 %v518, 2147483648
    %v535 = vxor.u32 %v519, 2147483648
    %v536 = vxor.u32 %v520, 2147483648
    %v537 = vxor.u32 %v521, 2147483648
    %v538 = vxor.u32 %v522, 2147483648
    %v539 = vxor.u32 %v523, 2147483648
    %v540 = vxor.u32 %v524, 2147483648
    %v541 = vxor.u32 %v525, 2147483648
    %v542 = vxor.u32 %v526, 2147483648
    %v543 = vxor.u32 %v527, 2147483648
    %v544 = vxor.u32 %v528, 2147483648
    %v545 = vxor.u32 %v529, 2147483648
    %v546 = vxor.u32 %v530, 2147483648
    %v547 = vxor.u32 %v531, 2147483648
    %v548 = vxor.u32 %v532, 2147483648
    %v549 = vmul.f32 %v533, 1.442695
    %v550 = vpow.pop %v549
    %v551 = vmul.f32 %v534, 1.442695
    %v552 = vpow.pop %v551
    %v553 = vmul.f32 %v535, 1.442695
    %v554 = vpow.pop %v553
    %v555 = vmul.f32 %v536, 1.442695
    %v556 = vpow.pop %v555
    %v557 = vmul.f32 %v537, 1.442695
    %v558 = vpow.pop %v557
    %v559 = vmul.f32 %v538, 1.442695
    %v560 = vpow.pop %v559
    %v561 = vmul.f32 %v539, 1.442695
    %v562 = vpow.pop %v561
    %v563 = vmul.f32 %v540, 1.442695
    %v564 = vpow.pop %v563
    %v565 = vmul.f32 %v541, 1.442695
    %v566 = vpow.pop %v565
    %v567 = vmul.f32 %v542, 1.442695
    %v568 = vpow.pop %v567
    %v569 = vmul.f32 %v543, 1.442695
    %v570 = vpow.pop %v569
    %v571 = vmul.f32 %v544, 1.442695
    %v572 = vpow.pop %v571
    %v573 = vmul.f32 %v545, 1.442695
    %v574 = vpow.pop %v573
    %v575 = vmul.f32 %v546, 1.442695
    %v576 = vpow.pop %v575
    %v577 = vmul.f32 %v547, 1.442695
    %v578 = vpow.pop %v577
    %v579 = vmul.f32 %v548, 1.442695
    %v580 = vpow.pop %v579
    %v581 = vadd.f32 %v550, 1.0
    %v582 = vadd.f32 %v552, 1.0
    %v583 = vadd.f32 %v554, 1.0
    %v584 = vadd.f32 %v556, 1.0
    %v585 = vadd.f32 %v558, 1.0
    %v586 = vadd.f32 %v560, 1.0
    %v587 = vadd.f32 %v562, 1.0
    %v588 = vadd.f32 %v564, 1.0
    %v589 = vadd.f32 %v566, 1.0
    %v590 = vadd.f32 %v568, 1.0
    %v591 = vadd.f32 %v570, 1.0
    %v592 = vadd.f32 %v572, 1.0
    %v593 = vadd.f32 %v574, 1.0
    %v594 = vadd.f32 %v576, 1.0
    %v595 = vadd.f32 %v578, 1.0
    %v596 = vadd.f32 %v580, 1.0
    %v597 = vrcp.pop %v581
    %v598 = vmul.f32 1.0, %v597
    %v599 = vrcp.pop %v582
    %v600 = vmul.f32 1.0, %v599
    %v601 = vrcp.pop %v583
    %v602 = vmul.f32 1.0, %v601
    %v603 = vrcp.pop %v584
    %v604 = vmul.f32 1.0, %v603
    %v605 = vrcp.pop %v585
    %v606 = vmul.f32 1.0, %v605
    %v607 = vrcp.pop %v586
    %v608 = vmul.f32 1.0, %v607
    %v609 = vrcp.pop %v587
    %v610 = vmul.f32 1.0, %v609
    %v611 = vrcp.pop %v588
    %v612 = vmul.f32 1.0, %v611
    %v613 = vrcp.pop %v589
    %v614 = vmul.f32 1.0, %v613
    %v615 = vrcp.pop %v590
    %v616 = vmul.f32 1.0, %v615
    %v617 = vrcp.pop %v591
    %v618 = vmul.f32 1.0, %v617
    %v619 = vrcp.pop %v592
    %v620 = vmul.f32 1.0, %v619
    %v621 = vrcp.pop %v593
    %v622 = vmul.f32 1.0, %v621
    %v623 = vrcp.pop %v594
    %v624 = vmul.f32 1.0, %v623
    %v625 = vrcp.pop %v595
    %v626 = vmul.f32 1.0, %v625
    %v627 = vrcp.pop %v596
    %v628 = vmul.f32 1.0, %v627
    %629 = vst.msk [vmem:[%s5] sm:$0xff] %vm479, %v598
    %630 = vst.msk [vmem:[%s5 + $0x8] sm:$0xff] %vm479, %v600
    %631 = vst.msk [vmem:[%s5 + $0x10] sm:$0xff] %vm479, %v602
    %632 = vst.msk [vmem:[%s5 + $0x18] sm:$0xff] %vm479, %v604
    %633 = vst.msk [vmem:[%s5 + $0x20] sm:$0xff] %vm479, %v606
    %634 = vst.msk [vmem:[%s5 + $0x28] sm:$0xff] %vm479, %v608
    %635 = vst.msk [vmem:[%s5 + $0x30] sm:$0xff] %vm479, %v610
    %636 = vst.msk [vmem:[%s5 + $0x38] sm:$0xff] %vm479, %v612
    %637 = vst.msk [vmem:[%s5 + $0x40] sm:$0xff] %vm479, %v614
    %638 = vst.msk [vmem:[%s5 + $0x48] sm:$0xff] %vm479, %v616
    %639 = vst.msk [vmem:[%s5 + $0x50] sm:$0xff] %vm479, %v618
    %640 = vst.msk [vmem:[%s5 + $0x58] sm:$0xff] %vm479, %v620
    %641 = vst.msk [vmem:[%s5 + $0x60] sm:$0xff] %vm479, %v622
    %642 = vst.msk [vmem:[%s5 + $0x68] sm:$0xff] %vm479, %v624
    %643 = vst.msk [vmem:[%s5 + $0x70] sm:$0xff] %vm479, %v626
    %644 = vst.msk [vmem:[%s5 + $0x78] sm:$0xff] %vm479, %v628
  $region29: #{tpu_custom_call.1} parent=0 // pred_fallthru
    _
  // Predicated region
  $region30: #{tpu_custom_call.1} parent=0 // pred_check
    _
  $region31: #{tpu_custom_call.1} parent=0 // pred_check_branch
    %646 = sbr.rel (0) target = $region33
  $region32: #{tpu_custom_call.1} parent=0 // pred_region
    _
  $region33: #{tpu_custom_call.1} parent=0 // pred_fallthru
    _
  // Predicated region
  $region34: #{tpu_custom_call.1} parent=0 // pred_check
    _
  $region35: #{tpu_custom_call.1} parent=0 // pred_check_branch
    %648 = sbr.rel (0) target = $region37
  $region36: #{tpu_custom_call.1} parent=0 // pred_region
    _
  $region37: #{tpu_custom_call.1} parent=0 // pred_fallthru
    _

</llo_original>
